<compile_context>
chip_gen: v7x
topology: tpu7x:2x2x1
jax: 0.10.0
libtpu: 0.0.40
codegen_flags: <defaults>
</compile_context>

<pallas_src>
import jax
import jax.numpy as jnp
from jax.experimental import pallas as pl
from jax.experimental.pallas import tpu as pltpu


def _round_up(x, m):
    return (x + m - 1) // m * m


def make_textcnn_kernel(l_pad, max_fs, emb_size):
    def kernel(emb_ref, wconv_ref, bconv_ref, mask_ref, lin_w_ref, lin_b_ref,
               out_ref):
        tb = emb_ref.shape[0]
        n_packed = wconv_ref.shape[-1]

        emb3 = emb_ref[...]                          # [TB, L_pad, E] bf16
        # f32 for the roll/concat path (exact; bf16 -> f32 is lossless) --
        # keeps the sublane rolls / minor-dim concat on well-supported
        # 32-bit lowering paths.  Cast back to bf16 right before the MXU.
        emb_f = emb3.astype(jnp.float32)

        # --- im2col along K: fold every conv tap into the contraction dim.
        # Tap k needs emb[:, t+k, :]; shift = l_pad-k == -k (mod L) on the
        # XLU.  Wrapped tail rows only feed time positions that are masked
        # before the pool, so the wrap-around is harmless.
        cols = [emb_f]
        for k in range(1, max_fs):
            cols.append(pltpu.roll(emb_f, shift=l_pad - k, axis=1))
        x = jnp.concatenate(cols, axis=-1)           # [TB, L_pad, max_fs*E] f32
        x2d = x.reshape(tb * l_pad, max_fs * emb_size).astype(jnp.bfloat16)

        # --- ONE MXU matmul for every tap of every filter-size group.
        conv = jnp.dot(x2d, wconv_ref[...],
                       preferred_element_type=jnp.float32)
        conv = conv.reshape(tb, l_pad, n_packed)     # [TB, L_pad, N_packed] f32

        # --- Mask invalid/wrapped time rows, time max-pool (sublane reduce),
        # then bias + ReLU once.
        conv = conv + mask_ref[...]                  # [L_pad, N] broadcast
        pooled = jnp.max(conv, axis=1)               # [TB, N_packed] f32
        pooled = jnp.maximum(pooled + bconv_ref[...], 0.0)

        # --- Classifier: single matmul over packed (concat-ordered) features.
        logits = jnp.dot(pooled.astype(lin_w_ref.dtype), lin_w_ref[...],
                         preferred_element_type=jnp.float32)
        out_ref[...] = logits + lin_b_ref[...]       # [TB, C_pad] f32

    return kernel


def textcnn_forward(X, params, *, filter_sizes, num_filters, seq_len,
                    emb_size, num_classes, batch_tile=None):
    nfs = len(filter_sizes)
    max_fs = max(filter_sizes)
    B = X.shape[0]
    F = num_filters
    C = num_classes

    l_pad = _round_up(seq_len, 8)              # sublane-aligned time axis
    n_packed = _round_up(nfs * F, 128)         # packed feature / conv-N dim
    c_pad = _round_up(C, 128)                  # lane-dense output
    k_total = max_fs * emb_size                # im2col contraction dim

    # --- Batch tiling: aim for ~512-1024 rows (TB * L_pad) per grid step.
    if batch_tile is None:
        batch_tile = max(8, min(256, ((1024 // l_pad) // 8) * 8 or 8))
    if B <= batch_tile:
        tb = B                                 # single grid step, no padding
    else:
        tb = max(8, (batch_tile // 8) * 8)     # multiple of 8 when grid > 1
    b_pad = _round_up(B, tb)

    # --- Embedding gather in bf16 (halves the dominant HBM stream); pad the
    # token ids (not the gathered tensor) so there is no extra full-tensor
    # pad/astype pass.
    emb_tbl = params["embedding"].astype(jnp.bfloat16)
    if b_pad != B or l_pad != seq_len:
        X = jnp.pad(X, ((0, b_pad - B), (0, l_pad - seq_len)))
    emb = jnp.take(emb_tbl, X, axis=0)         # [B_pad, L_pad, E] bf16

    # --- Packed conv weight: tap k of group g lives at rows k*E:(k+1)*E,
    # columns g*F:(g+1)*F (zeros elsewhere) -> one [max_fs*E, N_packed] RHS.
    wconv = jnp.zeros((k_total, n_packed), jnp.float32)
    bconv = jnp.zeros((1, n_packed), jnp.float32)
    for g, fs in enumerate(filter_sizes):
        w = params["conv_w"][g]                # [fs, E, F]
        for k in range(fs):
            wconv = wconv.at[k * emb_size:(k + 1) * emb_size,
                             g * F:(g + 1) * F].set(w[k])
        bconv = bconv.at[0, g * F:(g + 1) * F].set(params["conv_b"][g][0])
    wconv = wconv.astype(jnp.bfloat16)

    # --- Valid-time mask (per packed column): position t is valid for group g
    # iff t < seq_len - fs_g + 1; invalid rows -> -1e30 before the max-pool.
    valid_len = jnp.array([seq_len - fs + 1 for fs in filter_sizes], jnp.int32)
    grp = jnp.minimum(jnp.arange(n_packed) // F, nfs - 1)
    col_valid = valid_len[grp]                 # [N_packed]
    t_idx = jnp.arange(l_pad)[:, None]         # [L_pad, 1]
    mask = jnp.where(t_idx < col_valid[None, :], 0.0, -1e30).astype(jnp.float32)

    # --- Classifier weight: rows already in the packed (concat) order.
    lin_w = jnp.pad(params["lin_w"],
                    ((0, n_packed - nfs * F), (0, c_pad - C))
                    ).astype(jnp.bfloat16)
    lin_b = jnp.pad(params["lin_b"], ((0, 0), (0, c_pad - C))
                    ).astype(jnp.float32)

    # --- Generation-aware VMEM budget (v7x: 64 MiB physical -> cap ~48 MiB;
    # v5e/v6e: 128 MiB -> allow up to ~96-100 MiB).
    try:
        vmem_cap = pltpu.get_tpu_info().vmem_capacity_bytes
    except Exception:
        vmem_cap = 64 * 1024 * 1024
    vmem_limit = int(min(100 * 1024 * 1024, vmem_cap * 3 // 4))

    grid = (b_pad // tb,)
    in_specs = [pl.BlockSpec((tb, l_pad, emb_size), lambda i: (i, 0, 0))]
    in_specs += [pl.BlockSpec(a.shape, lambda i: (0, 0))
                 for a in (wconv, bconv, mask, lin_w, lin_b)]
    out_specs = pl.BlockSpec((tb, c_pad), lambda i: (i, 0))

    flops = (2 * b_pad * l_pad * k_total * n_packed
             + 2 * b_pad * n_packed * c_pad)
    bytes_accessed = (int(emb.size) * 2 + int(wconv.size) * 2
                      + int(bconv.size) * 4 + int(mask.size) * 4
                      + int(lin_w.size) * 2 + int(lin_b.size) * 4
                      + b_pad * c_pad * 4)
    cost = pl.CostEstimate(flops=int(flops), transcendentals=0,
                           bytes_accessed=int(bytes_accessed))

    kernel = make_textcnn_kernel(l_pad, max_fs, emb_size)

    out = pl.pallas_call(
        kernel,
        grid=grid,
        in_specs=in_specs,
        out_specs=out_specs,
        out_shape=jax.ShapeDtypeStruct((b_pad, c_pad), jnp.float32),
        compiler_params=pltpu.CompilerParams(
            dimension_semantics=("parallel",),
            vmem_limit_bytes=vmem_limit),
        cost_estimate=cost,
    )(emb, wconv, bconv, mask, lin_w, lin_b)
    return out[:B, :C]


def textcnn_reference(X, params, *, filter_sizes, num_filters, seq_len,
                      emb_size, num_classes):
    """Pure-JAX f32 mirror of the PyTorch forward, for correctness checking."""
    emb = params["embedding"][X]                          # [B, L, E]
    pooled_outputs = []
    for i, fs in enumerate(filter_sizes):
        w = params["conv_w"][i]                           # [fs, E, F]
        b = params["conv_b"][i][0]                        # [F]
        L_out = seq_len - fs + 1
        windows = jnp.stack([emb[:, p:p + fs, :] for p in range(L_out)], axis=1)
        h = jnp.einsum("blke,kef->blf", windows, w) + b   # conv + bias
        h = jnp.maximum(h, 0.0)                           # ReLU
        pooled_outputs.append(jnp.max(h, axis=1))         # max-pool over time
    h_pool = jnp.concatenate(pooled_outputs, axis=-1)     # [B, F_total]
    return h_pool @ params["lin_w"] + params["lin_b"]


if __name__ == "__main__":
    # Small, deterministic configuration consistent with the module.
    batch = 2
    vocab_size = 20
    emb_size = 32
    seq_len = 8
    num_filters = 4
    filter_sizes = [2, 3, 4]
    num_classes = 3
    num_filters_total = num_filters * len(filter_sizes)

    key = jax.random.PRNGKey(0)
    keys = jax.random.split(key, 10)

    params = {
        "embedding": 0.1 * jax.random.normal(keys[0], (vocab_size, emb_size),
                                             jnp.float32),
        "conv_w": [0.1 * jax.random.normal(keys[1 + i],
                                           (fs, emb_size, num_filters),
                                           jnp.float32)
                   for i, fs in enumerate(filter_sizes)],
        "conv_b": [0.1 * jax.random.normal(keys[4 + i], (1, num_filters),
                                           jnp.float32)
                   for i in range(len(filter_sizes))],
        "lin_w": 0.1 * jax.random.normal(keys[7],
                                         (num_filters_total, num_classes),
                                         jnp.float32),
        # PyTorch: self.Bias = nn.Parameter(torch.ones([num_classes]))
        "lin_b": jnp.ones((1, num_classes), jnp.float32),
    }

    X = jax.random.randint(keys[8], (batch, seq_len), 0, vocab_size,
                           dtype=jnp.int32)

    out = textcnn_forward(X, params,
                          filter_sizes=filter_sizes, num_filters=num_filters,
                          seq_len=seq_len, emb_size=emb_size,
                          num_classes=num_classes)
    out = jax.block_until_ready(out)

    ref = textcnn_reference(X, params,
                            filter_sizes=filter_sizes, num_filters=num_filters,
                            seq_len=seq_len, emb_size=emb_size,
                            num_classes=num_classes)
    assert out.shape == (batch, num_classes)
    # bf16 MXU operands (f32 accumulation) => loosened tolerance vs f32 ref.
    assert jnp.allclose(out, ref, rtol=1e-2, atol=1e-2), (out, ref)

    print("KERNEL_OK")
</pallas_src>

<mosaic_0001>
module attributes {stable_mosaic.version = 11 : i64} {
  func.func @kernel(%arg0: i32, %arg1: memref<2x8x32xbf16, #tpu.memory_space<vmem>>, %arg2: memref<128x128xbf16, #tpu.memory_space<vmem>>, %arg3: memref<1x128xf32, #tpu.memory_space<vmem>>, %arg4: memref<8x128xf32, #tpu.memory_space<vmem>>, %arg5: memref<128x128xbf16, #tpu.memory_space<vmem>>, %arg6: memref<1x128xf32, #tpu.memory_space<vmem>>, %arg7: memref<2x128xf32, #tpu.memory_space<vmem>>) attributes {dimension_semantics = [#tpu.dimension_semantics<parallel>], iteration_bounds = array<i64: 1>, scalar_prefetch = 0 : i64, scratch_operands = 0 : i64, tpu.core_type = #tpu.core_type<tc>, window_params = [{transform_indices = @transform_0, window_bounds = array<i64: 2, 8, 32>}, {pipeline_mode = #tpu.pipeline_mode<synchronous>, transform_indices = @transform_1, window_bounds = array<i64: 128, 128>}, {pipeline_mode = #tpu.pipeline_mode<synchronous>, transform_indices = @transform_2, window_bounds = array<i64: 1, 128>}, {pipeline_mode = #tpu.pipeline_mode<synchronous>, transform_indices = @transform_3, window_bounds = array<i64: 8, 128>}, {pipeline_mode = #tpu.pipeline_mode<synchronous>, transform_indices = @transform_4, window_bounds = array<i64: 128, 128>}, {pipeline_mode = #tpu.pipeline_mode<synchronous>, transform_indices = @transform_5, window_bounds = array<i64: 1, 128>}, {transform_indices = @transform_6, window_bounds = array<i64: 2, 128>}]} {
    %c0 = arith.constant 0 : index
    %c0_0 = arith.constant 0 : index
    %c0_1 = arith.constant 0 : index
    %0 = vector.load %arg1[%c0, %c0_0, %c0_1] : memref<2x8x32xbf16, #tpu.memory_space<vmem>>, vector<2x8x32xbf16>
    %1 = arith.extf %0 : vector<2x8x32xbf16> to vector<2x8x32xf32>
    %c7_i32 = arith.constant 7 : i32
    %2 = tpu.dynamic_rotate %1 by %c7_i32 dim 1 : vector<2x8x32xf32>, i32 -> vector<2x8x32xf32>
    %c6_i32 = arith.constant 6 : i32
    %3 = tpu.dynamic_rotate %1 by %c6_i32 dim 1 : vector<2x8x32xf32>, i32 -> vector<2x8x32xf32>
    %c5_i32 = arith.constant 5 : i32
    %4 = tpu.dynamic_rotate %1 by %c5_i32 dim 1 : vector<2x8x32xf32>, i32 -> vector<2x8x32xf32>
    %5 = tpu.concatenate %1, %2, %3, %4 in 2 : vector<2x8x32xf32>, vector<2x8x32xf32>, vector<2x8x32xf32>, vector<2x8x32xf32> -> vector<2x8x128xf32>
    %6 = vector.shape_cast %5 : vector<2x8x128xf32> to vector<16x128xf32>
    %7 = arith.truncf %6 : vector<16x128xf32> to vector<16x128xbf16>
    %c0_2 = arith.constant 0 : index
    %c0_3 = arith.constant 0 : index
    %8 = vector.load %arg2[%c0_2, %c0_3] : memref<128x128xbf16, #tpu.memory_space<vmem>>, vector<128x128xbf16>
    %cst = arith.constant dense<0.000000e+00> : vector<16x128xf32>
    %9 = tpu.matmul %7, %8, %cst {dimension_numbers = #tpu.dot_dimension_numbers<[1], [0], [0], [1], [0, 0, 1, 1], [], []>} : vector<16x128xbf16>, vector<128x128xbf16>, vector<16x128xf32> -> vector<16x128xf32>
    %10 = vector.shape_cast %9 : vector<16x128xf32> to vector<2x8x128xf32>
    %c0_4 = arith.constant 0 : index
    %c0_5 = arith.constant 0 : index
    %11 = vector.load %arg4[%c0_4, %c0_5] : memref<8x128xf32, #tpu.memory_space<vmem>>, vector<8x128xf32>
    %12 = vector.shape_cast %11 : vector<8x128xf32> to vector<1x8x128xf32>
    %13 = vector.broadcast %12 : vector<1x8x128xf32> to vector<2x8x128xf32>
    %14 = arith.addf %10, %13 : vector<2x8x128xf32>
    %cst_6 = arith.constant dense<0xFF800000> : vector<2x128xf32>
    %15 = vector.multi_reduction <maximumf>, %14, %cst_6 [1] : vector<2x8x128xf32> to vector<2x128xf32>
    %c0_7 = arith.constant 0 : index
    %c0_8 = arith.constant 0 : index
    %16 = vector.load %arg3[%c0_7, %c0_8] : memref<1x128xf32, #tpu.memory_space<vmem>>, vector<1x128xf32>
    %17 = vector.broadcast %16 : vector<1x128xf32> to vector<2x128xf32>
    %18 = arith.addf %15, %17 : vector<2x128xf32>
    %cst_9 = arith.constant 0.000000e+00 : f32
    %19 = vector.broadcast %cst_9 : f32 to vector<2x128xf32>
    %20 = arith.maximumf %18, %19 : vector<2x128xf32>
    %21 = arith.truncf %20 : vector<2x128xf32> to vector<2x128xbf16>
    %c0_10 = arith.constant 0 : index
    %c0_11 = arith.constant 0 : index
    %22 = vector.load %arg5[%c0_10, %c0_11] : memref<128x128xbf16, #tpu.memory_space<vmem>>, vector<128x128xbf16>
    %cst_12 = arith.constant dense<0.000000e+00> : vector<2x128xf32>
    %23 = tpu.matmul %21, %22, %cst_12 {dimension_numbers = #tpu.dot_dimension_numbers<[1], [0], [0], [1], [0, 0, 1, 1], [], []>} : vector<2x128xbf16>, vector<128x128xbf16>, vector<2x128xf32> -> vector<2x128xf32>
    %c0_13 = arith.constant 0 : index
    %c0_14 = arith.constant 0 : index
    %24 = vector.load %arg6[%c0_13, %c0_14] : memref<1x128xf32, #tpu.memory_space<vmem>>, vector<1x128xf32>
    %25 = vector.broadcast %24 : vector<1x128xf32> to vector<2x128xf32>
    %26 = arith.addf %23, %25 : vector<2x128xf32>
    %c0_15 = arith.constant 0 : index
    %c0_16 = arith.constant 0 : index
    %27 = vector.load %arg7[%c0_15, %c0_16] : memref<2x128xf32, #tpu.memory_space<vmem>>, vector<2x128xf32>
    tpu.vector_store %arg7[%c0_15, %c0_16], %26 {strides = array<i32>} : memref<2x128xf32, #tpu.memory_space<vmem>>, vector<2x128xf32>,
    return
  }
  func.func @transform_0(%arg0: i32) -> (i32, i32, i32) {
    %c0_i32 = arith.constant 0 : i32
    %c0_i32_0 = arith.constant 0 : i32
    %c0_i32_1 = arith.constant 0 : i32
    return %arg0, %c0_i32, %c0_i32_0 : i32, i32, i32
  }
  func.func @transform_1(%arg0: i32) -> (i32, i32) {
    %c0_i32 = arith.constant 0 : i32
    %c0_i32_0 = arith.constant 0 : i32
    %c0_i32_1 = arith.constant 0 : i32
    return %c0_i32, %c0_i32_0 : i32, i32
  }
  func.func @transform_2(%arg0: i32) -> (i32, i32) {
    %c0_i32 = arith.constant 0 : i32
    %c0_i32_0 = arith.constant 0 : i32
    %c0_i32_1 = arith.constant 0 : i32
    return %c0_i32, %c0_i32_0 : i32, i32
  }
  func.func @transform_3(%arg0: i32) -> (i32, i32) {
    %c0_i32 = arith.constant 0 : i32
    %c0_i32_0 = arith.constant 0 : i32
    %c0_i32_1 = arith.constant 0 : i32
    return %c0_i32, %c0_i32_0 : i32, i32
  }
  func.func @transform_4(%arg0: i32) -> (i32, i32) {
    %c0_i32 = arith.constant 0 : i32
    %c0_i32_0 = arith.constant 0 : i32
    %c0_i32_1 = arith.constant 0 : i32
    return %c0_i32, %c0_i32_0 : i32, i32
  }
  func.func @transform_5(%arg0: i32) -> (i32, i32) {
    %c0_i32 = arith.constant 0 : i32
    %c0_i32_0 = arith.constant 0 : i32
    %c0_i32_1 = arith.constant 0 : i32
    return %c0_i32, %c0_i32_0 : i32, i32
  }
  func.func @transform_6(%arg0: i32) -> (i32, i32) {
    %c0_i32 = arith.constant 0 : i32
    %c0_i32_0 = arith.constant 0 : i32
    return %arg0, %c0_i32 : i32, i32
  }
}

</mosaic_0001>

<llo_original>
// kernel: tpu_custom_call.1
$region0: #{tpu_custom_call.1}
  #allocation0 [shape = 'u32[]', space=smem, size = 0x4, offset = 0x4, fixed_abs, tag = 'smem constant byte address 0x4 - core index']
  #allocation1 [shape = 'u32[144,128]{1,0:T(1,128)}', space=vmem, size = 0x12000, scoped, tag = 'internal scratch']
  %s0 = inlined_call_operand.hbm [shape: bf16[2,8,32], index: 0, kind: input, shape index: {}]
  %s1 = inlined_call_operand.hbm [shape: bf16[128,128], index: 1, kind: input, shape index: {}]
  %s2 = inlined_call_operand.vmem [shape: f32[1,128], index: 2, kind: input, shape index: {}]
  %s3 = inlined_call_operand.vmem [shape: f32[8,128], index: 3, kind: input, shape index: {}]
  %s4 = inlined_call_operand.hbm [shape: bf16[128,128], index: 4, kind: input, shape index: {}]
  %s5 = inlined_call_operand.vmem [shape: f32[1,128], index: 5, kind: input, shape index: {}]
  %s6 = inlined_call_operand.hbm [shape: f32[2,128], index: 6, kind: output, shape index: {}]
  %s7 = sld [smem:[#allocation0]]
  $region46: #{tpu_custom_call.1} parent=0
    _
  %s9 = ssub.s32 1, %s7
  %s10 = scalar_select 0, %s9, %s7
  $region1: #{tpu_custom_call.1} parent=0
    #allocation2 [shape = 'u8[4096]{0}', space=vmem, size = 0x1000, scoped, tag = 'input window, operand 0, single buffered']
    #allocation3 [shape = 's32[1]{0}', space=sflag, size = 0x4, scoped, tag = 'scoped memory for tpu_custom_call.1']
    #allocation4 [shape = 's32[1]{0}', space=sflag, size = 0x4, scoped, tag = 'scoped memory for tpu_custom_call.1']
    #allocation5 [shape = 'u8[32768]{0}', space=vmem, size = 0x8000, scoped, tag = 'input window, operand 1, single buffered']
    #allocation6 [shape = 's32[1]{0}', space=sflag, size = 0x4, scoped, tag = 'scoped memory for tpu_custom_call.1']
    #allocation7 [shape = 'u8[32768]{0}', space=vmem, size = 0x8000, scoped, tag = 'input window, operand 4, single buffered']
    #allocation8 [shape = 'u8[1024]{0}', space=vmem, size = 0x400, scoped, tag = 'output window, operand 0, single buffered']
    %11 = vsyncpa [#allocation3], 0
    %12 = vsyncpa [#allocation6], 0
    %13 = vsyncpa [#allocation4], 0
    // Predicated region
    $region2: #{tpu_custom_call.1} parent=1 // pred_check
      _
    $region3: #{tpu_custom_call.1} parent=1 // pred_check_branch
      %15 = sbr.rel (0) target = $region5
    $region4: #{tpu_custom_call.1} parent=1 // pred_region
      %s17 = ssub.s32 128, 128
      %18 = vsyncadd [#allocation3], %s17
      %s19 = sshll.u32 [#allocation2], 4
      %s20 = int_to_ptr.vmem [resolvable:$true] %s19
      %25 = dma.hbm_to_vmem [thread:$0]  %s0, 128, %s20, [#allocation3], 64, 64, 4
    $region5: #{tpu_custom_call.1} parent=1 // pred_fallthru
      _
    // Predicated region
    $region6: #{tpu_custom_call.1} parent=1 // pred_check
      _
    $region7: #{tpu_custom_call.1} parent=1 // pred_check_branch
      %27 = sbr.rel (0) target = $region9
    $region8: #{tpu_custom_call.1} parent=1 // pred_region
      %s29 = ssub.s32 1024, 1024
      %30 = vsyncadd [#allocation6], %s29
      %s31 = sshll.u32 [#allocation5], 4
      %s32 = int_to_ptr.vmem [resolvable:$true] %s31
      %37 = dma.hbm_to_vmem [thread:$0]  %s1, 1024, %s32, [#allocation6], 64, 64, 4
    $region9: #{tpu_custom_call.1} parent=1 // pred_fallthru
      _
    // Predicated region
    $region10: #{tpu_custom_call.1} parent=1 // pred_check
      _
    $region11: #{tpu_custom_call.1} parent=1 // pred_check_branch
      %39 = sbr.rel (0) target = $region13
    $region12: #{tpu_custom_call.1} parent=1 // pred_region
      _
    $region13: #{tpu_custom_call.1} parent=1 // pred_fallthru
      _
    // Predicated region
    $region14: #{tpu_custom_call.1} parent=1 // pred_check
      _
    $region15: #{tpu_custom_call.1} parent=1 // pred_check_branch
      %41 = sbr.rel (0) target = $region17
    $region16: #{tpu_custom_call.1} parent=1 // pred_region
      _
    $region17: #{tpu_custom_call.1} parent=1 // pred_fallthru
      _
    // Predicated region
    $region18: #{tpu_custom_call.1} parent=1 // pred_check
      _
    $region19: #{tpu_custom_call.1} parent=1 // pred_check_branch
      %43 = sbr.rel (0) target = $region21
    $region20: #{tpu_custom_call.1} parent=1 // pred_region
      %s45 = ssub.s32 1024, 1024
      %46 = vsyncadd [#allocation6], %s45
      %s47 = sshll.u32 [#allocation7], 4
      %s48 = int_to_ptr.vmem [resolvable:$true] %s47
      %53 = dma.hbm_to_vmem [thread:$0]  %s4, 1024, %s48, [#allocation6], 64, 64, 4
    $region21: #{tpu_custom_call.1} parent=1 // pred_fallthru
      _
    // Predicated region
    $region22: #{tpu_custom_call.1} parent=1 // pred_check
      _
    $region23: #{tpu_custom_call.1} parent=1 // pred_check_branch
      %55 = sbr.rel (0) target = $region25
    $region24: #{tpu_custom_call.1} parent=1 // pred_region
      _
    $region25: #{tpu_custom_call.1} parent=1 // pred_fallthru
      _
    // Predicated region
    $region26: #{tpu_custom_call.1} parent=1 // pred_check
      _
    $region27: #{tpu_custom_call.1} parent=1 // pred_check_branch
      %57 = sbr.rel (0) target = $region29
    $region28: #{tpu_custom_call.1} parent=1 // pred_region
      %58 = dma.done [#allocation3], 128
    $region29: #{tpu_custom_call.1} parent=1 // pred_fallthru
      _
    // Predicated region
    $region30: #{tpu_custom_call.1} parent=1 // pred_check
      _
    $region31: #{tpu_custom_call.1} parent=1 // pred_check_branch
      %60 = sbr.rel (0) target = $region33
    $region32: #{tpu_custom_call.1} parent=1 // pred_region
      %61 = dma.done [#allocation6], 1024
    $region33: #{tpu_custom_call.1} parent=1 // pred_fallthru
      _
    // Predicated region
    $region34: #{tpu_custom_call.1} parent=1 // pred_check
      _
    $region35: #{tpu_custom_call.1} parent=1 // pred_check_branch
      %63 = sbr.rel (0) target = $region37
    $region36: #{tpu_custom_call.1} parent=1 // pred_region
      %64 = dma.done [#allocation6], 1024
    $region37: #{tpu_custom_call.1} parent=1 // pred_fallthru
      _
    %v66 = vld [vmem:[#allocation2] sm:$0xf]
    %v67 = vld [vmem:[#allocation2 + $0x4] sm:$0xf]
    %v68 = vunpack.c.l.bf16 %v66
    %v69 = vunpack.c.l.bf16 %v67
    %v70 = vrot.slane %v68, 1
    %v71 = vrot.slane %v69, 1
    %v72 = vrot.slane %v68, 2
    %v73 = vrot.slane %v69, 2
    %v74 = vrot.slane %v68, 3
    %v75 = vrot.slane %v69, 3
    %78 = vrot.lane.b32.xlu0 %v70, 32
    %v79 = vpop.permute.xlu0 %78
    %80 = vrot.lane.b32.xlu0 %v71, 32
    %v81 = vpop.permute.xlu0 %80
    %86 = vrot.lane.b32.xlu0 %v72, 64
    %v87 = vpop.permute.xlu0 %86
    %88 = vrot.lane.b32.xlu0 %v73, 64
    %v89 = vpop.permute.xlu0 %88
    %94 = vrot.lane.b32.xlu0 %v74, 96
    %v95 = vpop.permute.xlu0 %94
    %96 = vrot.lane.b32.xlu0 %v75, 96
    %v97 = vpop.permute.xlu0 %96
    %vm100 = vcmask 261120
    %v101 = vsel %vm100, %v68, %v79
    %v102 = vsel %vm100, %v69, %v81
    %vm103 = vcmask 523264
    %v104 = vsel %vm103, %v101, %v87
    %v105 = vsel %vm103, %v102, %v89
    %vm106 = vcmask 785408
    %v107 = vsel %vm106, %v104, %v95
    %v108 = vsel %vm106, %v105, %v97
    %v109 = vpack.c.bf16 %v108, %v107
    %v110 = vld [vmem:[#allocation5] sm:$0xf]
    %v111 = vld [vmem:[#allocation5 + $0x4] sm:$0xf]
    %v112 = vld [vmem:[#allocation5 + $0x8] sm:$0xf]
    %v113 = vld [vmem:[#allocation5 + $0xc] sm:$0xf]
    %v114 = vld [vmem:[#allocation5 + $0x10] sm:$0xf]
    %v115 = vld [vmem:[#allocation5 + $0x14] sm:$0xf]
    %v116 = vld [vmem:[#allocation5 + $0x18] sm:$0xf]
    %v117 = vld [vmem:[#allocation5 + $0x1c] sm:$0xf]
    %v118 = vld [vmem:[#allocation5 + $0x20] sm:$0xf]
    %v119 = vld [vmem:[#allocation5 + $0x24] sm:$0xf]
    %v120 = vld [vmem:[#allocation5 + $0x28] sm:$0xf]
    %v121 = vld [vmem:[#allocation5 + $0x2c] sm:$0xf]
    %v122 = vld [vmem:[#allocation5 + $0x30] sm:$0xf]
    %v123 = vld [vmem:[#allocation5 + $0x34] sm:$0xf]
    %v124 = vld [vmem:[#allocation5 + $0x38] sm:$0xf]
    %v125 = vld [vmem:[#allocation5 + $0x3c] sm:$0xf]
    %v142 = vunpack.c.l.b16 %v110
    %v143 = vunpack.c.l.b16 %v111
    %v144 = vunpack.c.l.b16 %v112
    %v145 = vunpack.c.l.b16 %v113
    %v146 = vunpack.c.l.b16 %v114
    %v147 = vunpack.c.l.b16 %v115
    %v148 = vunpack.c.l.b16 %v116
    %v149 = vunpack.c.l.b16 %v117
    %v150 = vunpack.c.l.b16 %v118
    %v151 = vunpack.c.l.b16 %v119
    %v152 = vunpack.c.l.b16 %v120
    %v153 = vunpack.c.l.b16 %v121
    %v154 = vunpack.c.l.b16 %v122
    %v155 = vunpack.c.l.b16 %v123
    %v156 = vunpack.c.l.b16 %v124
    %v157 = vunpack.c.l.b16 %v125
    %v158 = vpack.c.b16 %v143, %v142
    %v159 = vpack.c.b16 %v145, %v144
    %v160 = vpack.c.b16 %v147, %v146
    %v161 = vpack.c.b16 %v149, %v148
    %v162 = vpack.c.b16 %v151, %v150
    %v163 = vpack.c.b16 %v153, %v152
    %v164 = vpack.c.b16 %v155, %v154
    %v165 = vpack.c.b16 %v157, %v156
    %174 = vmatprep.subr.bf16.mxu0 0
    %175 = vmatpush1.bf16.msra.mxu0 %v158
    %176 = vmatprep.subr.bf16.mxu0 0
    %177 = vmatpush1.bf16.msra.mxu0 %v159
    %178 = vmatprep.subr.bf16.mxu0 0
    %179 = vmatpush1.bf16.msra.mxu0 %v160
    %180 = vmatprep.subr.bf16.mxu0 0
    %181 = vmatpush1.bf16.msra.mxu0 %v161
    %182 = vmatprep.subr.bf16.mxu0 0
    %183 = vmatpush1.bf16.msra.mxu0 %v162
    %184 = vmatprep.subr.bf16.mxu0 0
    %185 = vmatpush1.bf16.msra.mxu0 %v163
    %186 = vmatprep.subr.bf16.mxu0 0
    %187 = vmatpush1.bf16.msra.mxu0 %v164
    %188 = vmatprep.subr.bf16.mxu0 0
    %189 = vmatpush1.bf16.msra.mxu0 %v165
    %190 = vmatprep.subr.bf16.mxu0 0
    %191 = vmatpush1.bf16.msra.mxu0 0
    %192 = vmatprep.subr.bf16.mxu0 0
    %193 = vmatpush1.bf16.msra.mxu0 0
    %194 = vmatprep.subr.bf16.mxu0 0
    %195 = vmatpush1.bf16.msra.mxu0 0
    %196 = vmatprep.subr.bf16.mxu0 0
    %197 = vmatpush1.bf16.msra.mxu0 0
    %198 = vmatprep.subr.bf16.mxu0 0
    %199 = vmatpush1.bf16.msra.mxu0 0
    %200 = vmatprep.subr.bf16.mxu0 0
    %201 = vmatpush1.bf16.msra.mxu0 0
    %202 = vmatprep.subr.bf16.mxu0 0
    %203 = vmatpush1.bf16.msra.mxu0 0
    %204 = vmatprep.subr.bf16.mxu0 0
    %205 = vmatpush1.bf16.msra.mxu0 0
    %206 = vmatprep.mubr.bf16.mxu0 0
    %207 = vmatmul.mubr.bf16.gmra.mrb[0].mxu0 %v109
    %v208 = vpop.f32.mrb[0].mxu0
    %v209 = vadd.f32 0.0, %v208
    %v210 = vpop.f32.mrb[0].mxu0
    %v211 = vpop.f32.mrb[0].mxu0
    %v212 = vadd.f32 0.0, %v211
    %v213 = vpop.f32.mrb[0].mxu0
    %214 = vdwg.mxu0
    %v215 = vld [vmem:[%s3] sm:$0xff]
    %v216 = vadd.f32 %v209, %v215
    %v217 = vadd.f32 %v212, %v215
    %v218 = vrot.slane %v216, 4
    %v219 = vmax.f32 %v216, %v218
    %v220 = vrot.slane %v219, 2
    %v221 = vmax.f32 %v219, %v220
    %v222 = vrot.slane %v221, 1
    %v223 = vmax.f32 %v221, %v222
    %v224 = vrot.slane %v217, 4
    %v225 = vmax.f32 %v217, %v224
    %v226 = vrot.slane %v225, 2
    %v227 = vmax.f32 %v225, %v226
    %v228 = vrot.slane %v227, 1
    %v229 = vmax.f32 %v227, %v228
    %v230 = vld [vmem:[%s2] sm:$0x1]
    %v232 = vlaneseq
    %v233 = vshrl.u32 %v232, 7
    %v234 = vsub.s32 0, %v233
    %v235 = vrot.slane %v230, %v234
    %v237 = vadd.f32 %v223, %v235
    %v238 = vadd.f32 %v229, %v235
    %v239 = vmax.f32 %v237, 0.0
    %v240 = vmax.f32 %v238, 0.0
    %v241 = vpack.c.bf16 %v239, %v239
    %v242 = vpack.c.bf16 %v240, %v240
    %v243 = vld [vmem:[#allocation7] sm:$0xf]
    %v244 = vld [vmem:[#allocation7 + $0x4] sm:$0xf]
    %v245 = vld [vmem:[#allocation7 + $0x8] sm:$0xf]
    %v246 = vld [vmem:[#allocation7 + $0xc] sm:$0xf]
    %v247 = vld [vmem:[#allocation7 + $0x10] sm:$0xf]
    %v248 = vld [vmem:[#allocation7 + $0x14] sm:$0xf]
    %v249 = vld [vmem:[#allocation7 + $0x18] sm:$0xf]
    %v250 = vld [vmem:[#allocation7 + $0x1c] sm:$0xf]
    %v251 = vld [vmem:[#allocation7 + $0x20] sm:$0xf]
    %v252 = vld [vmem:[#allocation7 + $0x24] sm:$0xf]
    %v253 = vld [vmem:[#allocation7 + $0x28] sm:$0xf]
    %v254 = vld [vmem:[#allocation7 + $0x2c] sm:$0xf]
    %v255 = vld [vmem:[#allocation7 + $0x30] sm:$0xf]
    %v256 = vld [vmem:[#allocation7 + $0x34] sm:$0xf]
    %v257 = vld [vmem:[#allocation7 + $0x38] sm:$0xf]
    %v258 = vld [vmem:[#allocation7 + $0x3c] sm:$0xf]
    %v259 = vld [vmem:[%s5] sm:$0x1]
    %v261 = vlaneseq
    %v262 = vshrl.u32 %v261, 7
    %v263 = vsub.s32 0, %v262
    %v264 = vrot.slane %v259, %v263
    %v268 = vunpack.c.l.b16 %v241
    %v269 = vunpack.c.l.b16 %v242
    %v270 = vrot.slane %v269, 7
    %vm271 = vcmask 1041409
    %v272 = vsel %vm271, %v270, %v268
    %v273 = vpack.c.b16 %v272, %v272
    %v291 = vunpack.c.l.b16 %v243
    %v292 = vunpack.c.l.b16 %v244
    %v293 = vunpack.c.l.b16 %v245
    %v294 = vunpack.c.l.b16 %v246
    %v295 = vunpack.c.l.b16 %v247
    %v296 = vunpack.c.l.b16 %v248
    %v297 = vunpack.c.l.b16 %v249
    %v298 = vunpack.c.l.b16 %v250
    %v299 = vunpack.c.l.b16 %v251
    %v300 = vunpack.c.l.b16 %v252
    %v301 = vunpack.c.l.b16 %v253
    %v302 = vunpack.c.l.b16 %v254
    %v303 = vunpack.c.l.b16 %v255
    %v304 = vunpack.c.l.b16 %v256
    %v305 = vunpack.c.l.b16 %v257
    %v306 = vunpack.c.l.b16 %v258
    %v307 = vpack.c.b16 %v292, %v291
    %v308 = vpack.c.b16 %v294, %v293
    %v309 = vpack.c.b16 %v296, %v295
    %v310 = vpack.c.b16 %v298, %v297
    %v311 = vpack.c.b16 %v300, %v299
    %v312 = vpack.c.b16 %v302, %v301
    %v313 = vpack.c.b16 %v304, %v303
    %v314 = vpack.c.b16 %v306, %v305
    %323 = vmatprep.subr.bf16.mxu0 0
    %324 = vmatpush1.bf16.msra.mxu0 %v307
    %325 = vmatprep.subr.bf16.mxu0 0
    %326 = vmatpush1.bf16.msra.mxu0 %v308
    %327 = vmatprep.subr.bf16.mxu0 0
    %328 = vmatpush1.bf16.msra.mxu0 %v309
    %329 = vmatprep.subr.bf16.mxu0 0
    %330 = vmatpush1.bf16.msra.mxu0 %v310
    %331 = vmatprep.subr.bf16.mxu0 0
    %332 = vmatpush1.bf16.msra.mxu0 %v311
    %333 = vmatprep.subr.bf16.mxu0 0
    %334 = vmatpush1.bf16.msra.mxu0 %v312
    %335 = vmatprep.subr.bf16.mxu0 0
    %336 = vmatpush1.bf16.msra.mxu0 %v313
    %337 = vmatprep.subr.bf16.mxu0 0
    %338 = vmatpush1.bf16.msra.mxu0 %v314
    %339 = vmatprep.subr.bf16.mxu0 0
    %340 = vmatpush1.bf16.msra.mxu0 0
    %341 = vmatprep.subr.bf16.mxu0 0
    %342 = vmatpush1.bf16.msra.mxu0 0
    %343 = vmatprep.subr.bf16.mxu0 0
    %344 = vmatpush1.bf16.msra.mxu0 0
    %345 = vmatprep.subr.bf16.mxu0 0
    %346 = vmatpush1.bf16.msra.mxu0 0
    %347 = vmatprep.subr.bf16.mxu0 0
    %348 = vmatpush1.bf16.msra.mxu0 0
    %349 = vmatprep.subr.bf16.mxu0 0
    %350 = vmatpush1.bf16.msra.mxu0 0
    %351 = vmatprep.subr.bf16.mxu0 0
    %352 = vmatpush1.bf16.msra.mxu0 0
    %353 = vmatprep.subr.bf16.mxu0 0
    %354 = vmatpush1.bf16.msra.mxu0 0
    %355 = vmatprep.mubr.bf16.mxu0 0
    %356 = vmatmul.mubr.bf16.gmra.mrb[0].mxu0 %v273
    %v357 = vpop.f32.mrb[0].mxu0
    %v358 = vadd.f32 %v264, %v357
    %v359 = vpop.f32.mrb[0].mxu0
    %v360 = vpop.f32.mrb[0].mxu0
    %v361 = vpop.f32.mrb[0].mxu0
    %362 = vdwg.mxu0
    %363 = vst [vmem:[#allocation8] sm:$0x3] %v358
    // Predicated region
    $region38: #{tpu_custom_call.1} parent=1 // pred_check
      _
    $region39: #{tpu_custom_call.1} parent=1 // pred_check_branch
      %365 = sbr.rel (0) target = $region41
    $region40: #{tpu_custom_call.1} parent=1 // pred_region
      %s367 = ssub.s32 32, 32
      %368 = vsyncadd [#allocation4], %s367
      %s370 = sshll.u32 [#allocation8], 4
      %s371 = int_to_ptr.vmem [resolvable:$true] %s370
      %373 = dma.vmem_to_hbm [thread:$0]  %s371, 32, %s6, [#allocation4]
    $region41: #{tpu_custom_call.1} parent=1 // pred_fallthru
      _
    // Predicated region
    $region42: #{tpu_custom_call.1} parent=1 // pred_check
      _
    $region43: #{tpu_custom_call.1} parent=1 // pred_check_branch
      %375 = sbr.rel (0) target = $region45
    $region44: #{tpu_custom_call.1} parent=1 // pred_region
      %376 = dma.done [#allocation4], 32
    $region45: #{tpu_custom_call.1} parent=1 // pred_fallthru
      _
    %377 = vsyncpa [#allocation3], 1
    %378 = vsyncpa [#allocation6], 1
    %379 = vsyncpa [#allocation4], 1

</llo_original>
